<compile_context>
chip_gen: v7x
topology: tpu7x:2x2x1
jax: 0.10.0
libtpu: 0.0.40
codegen_flags: <defaults>
</compile_context>

<pallas_src>
import functools
import math

import jax
import jax.numpy as jnp
import numpy as np
from jax.experimental import pallas as pl
from jax.experimental.pallas import tpu as pltpu

LN_EPS = 1e-5  # PyTorch nn.LayerNorm default

# Fixed MyMLP configuration implemented by the fused kernel.
C_IN, H1, H2, C_OUT = 32, 64, 64, 16


def _round_up(x, m):
    return ((x + m - 1) // m) * m


def _layernorm(y, gamma, beta):
    # Single-pass LN: E[y] and E[y^2] in one sweep, var = E[y^2] - mean^2.
    # Slightly less stable than the two-pass form but fine at LN magnitudes;
    # rsqrt goes to the EUP slot (nearly free).
    mean = jnp.mean(y, axis=-1, keepdims=True)
    mean_sq = jnp.mean(y * y, axis=-1, keepdims=True)
    var = mean_sq - mean * mean
    return (y - mean) * jax.lax.rsqrt(var + LN_EPS) * gamma + beta


# ----------------------------------------------------------------------------
# Fused kernel: 3 Linear layers + LN + PReLU in one pass over a row tile.
# ----------------------------------------------------------------------------
def fused_mlp_kernel(alpha_ref, x_ref, w1_ref, w2_ref, w3_ref, p_ref, o_ref,
                     *, compute_dtype):
    # p_ref (8, 128) rows: 0=b1 1=g1 2=be1 3=b2 4=g2 5=be2 6=b3 7=unused
    # (all zero-padded to 128 lanes).  alpha_ref (2,) in SMEM: PReLU alphas.

    # x streamed as f32; cast to the MXU input dtype here (in VMEM), not in the
    # wrapper (avoids a separate un-hidden XLA pass over x).
    x = x_ref[...].astype(compute_dtype)

    # ---- Layer 1: Linear(C_IN -> H1) + LayerNorm + PReLU --------------------
    y = jnp.dot(x, w1_ref[...], preferred_element_type=jnp.float32)
    y = y + p_ref[0:1, 0:H1]
    y = _layernorm(y, p_ref[1:2, 0:H1], p_ref[2:3, 0:H1])
    y = jnp.where(y >= 0, y, alpha_ref[0] * y)

    # ---- Layer 2: Linear(H1 -> H2) + LayerNorm + PReLU ----------------------
    y = jnp.dot(y.astype(compute_dtype), w2_ref[...],
                preferred_element_type=jnp.float32)
    y = y + p_ref[3:4, 0:H2]
    y = _layernorm(y, p_ref[4:5, 0:H2], p_ref[5:6, 0:H2])
    y = jnp.where(y >= 0, y, alpha_ref[1] * y)

    # ---- Layer 3: Linear(H2 -> C_OUT), Identity -----------------------------
    y = jnp.dot(y.astype(compute_dtype), w3_ref[...],
                preferred_element_type=jnp.float32)
    y = y + p_ref[6:7, 0:C_OUT]
    o_ref[...] = y.astype(o_ref.dtype)


# ----------------------------------------------------------------------------
# Wrapper
# ----------------------------------------------------------------------------
def mymlp_forward(x, params, *, tile_n=4096, compute_dtype=jnp.float32):
    """Fused MyMLP forward.  x: (N, C_IN) float32; returns (N, C_OUT)."""
    N = x.shape[0]
    assert x.shape[1] == C_IN
    out_dtype = x.dtype

    # Row tile: sublane-aligned, capped at ~N/2 so the row grid has >=2 steps
    # whenever N allows it (lets v7x shard the "parallel" axis across 2 TCs).
    sub = 8
    cap = max(sub, _round_up(pl.cdiv(N, 2), sub))
    tile_n = max(sub, min(_round_up(tile_n, sub), cap))
    grid_n = pl.cdiv(N, tile_n)   # ragged edge block masked on writeback

    # Weights are tiny & VMEM-resident; pre-casting them once is negligible.
    w1 = params["w1"].astype(compute_dtype)
    w2 = params["w2"].astype(compute_dtype)
    w3 = params["w3"].astype(compute_dtype)
    pslab = params["pslab"]          # (8, 128) f32
    alphas = params["alphas"]        # (2,)     f32

    kernel = functools.partial(fused_mlp_kernel, compute_dtype=compute_dtype)

    w_bytes = ((C_IN * H1 + H1 * H2 + H2 * C_OUT)
               * jnp.dtype(compute_dtype).itemsize)
    cost = pl.CostEstimate(
        flops=2 * N * (C_IN * H1 + H1 * H2 + H2 * C_OUT) + 20 * N * H1,
        transcendentals=2 * N,                                   # rsqrt per LN row
        bytes_accessed=N * (C_IN + C_OUT) * 4 + w_bytes + 8 * 128 * 4 + 8,
    )

    out = pl.pallas_call(
        kernel,
        out_shape=jax.ShapeDtypeStruct((N, C_OUT), out_dtype),
        grid=(grid_n,),
        in_specs=[
            pl.BlockSpec(memory_space=pltpu.MemorySpace.SMEM),   # alphas (2,)
            pl.BlockSpec((tile_n, C_IN), lambda i: (i, 0)),      # x rows (f32)
            # Constant block indices: Pallas skips re-DMA for revisited blocks,
            # so these stay VMEM-resident across the whole grid.
            pl.BlockSpec((C_IN, H1), lambda i: (0, 0)),          # W1
            pl.BlockSpec((H1, H2), lambda i: (0, 0)),            # W2
            pl.BlockSpec((H2, C_OUT), lambda i: (0, 0)),         # W3 (unpadded)
            pl.BlockSpec((8, 128), lambda i: (0, 0)),            # bias/gamma/beta slab
        ],
        out_specs=pl.BlockSpec((tile_n, C_OUT), lambda i: (i, 0)),
        compiler_params=pltpu.CompilerParams(
            # Row axis is embarrassingly parallel -> shards across 2 TCs on v7x.
            dimension_semantics=("parallel",),
            vmem_limit_bytes=32 * 1024 * 1024),
        cost_estimate=cost,
    )(alphas, x, w1, w2, w3, pslab)

    return out


# ----------------------------------------------------------------------------
# Parameters (deterministic, matches MyMLP.__init__ semantics)
# ----------------------------------------------------------------------------
def xavier_uniform(key, fan_out, fan_in, dtype=jnp.float32):
    bound = math.sqrt(6.0 / (fan_in + fan_out))
    return jax.random.uniform(key, (fan_out, fan_in), dtype=dtype,
                              minval=-bound, maxval=bound)


def build_params(key):
    k1, k2, k3 = jax.random.split(key, 3)
    # nn.Linear weights are [out, in]; store transposed so kernel does x @ W.
    w1 = jnp.asarray(xavier_uniform(k1, H1, C_IN).T)      # (C_IN, H1)
    w2 = jnp.asarray(xavier_uniform(k2, H2, H1).T)        # (H1, H2)
    w3 = jnp.asarray(xavier_uniform(k3, C_OUT, H2).T)     # (H2, C_OUT)

    b1 = jnp.zeros((H1,), jnp.float32)                    # MyLinear: zero bias
    b2 = jnp.zeros((H2,), jnp.float32)
    b3 = jnp.zeros((C_OUT,), jnp.float32)
    g1 = jnp.ones((H1,), jnp.float32)                     # LayerNorm weight
    be1 = jnp.zeros((H1,), jnp.float32)                   # LayerNorm bias
    g2 = jnp.ones((H2,), jnp.float32)
    be2 = jnp.zeros((H2,), jnp.float32)
    alphas = jnp.full((2,), 0.25, jnp.float32)            # MyPReLU init=0.25

    def row(v):
        return jnp.zeros((128,), jnp.float32).at[:v.shape[0]].set(v)

    # Single (8, 128) VMEM slab with all small per-layer vectors.
    pslab = jnp.stack([row(b1), row(g1), row(be1),
                       row(b2), row(g2), row(be2),
                       row(b3), jnp.zeros((128,), jnp.float32)])

    return dict(w1=w1, w2=w2, w3=w3, pslab=pslab, alphas=alphas,
                b1=b1, b2=b2, b3=b3, g1=g1, be1=be1, g2=g2, be2=be2)


# ----------------------------------------------------------------------------
# Pure-JAX reference (mirrors the PyTorch module)
# ----------------------------------------------------------------------------
def mymlp_reference(x, p):
    def ln(y, g, b):
        mean = jnp.mean(y, axis=-1, keepdims=True)
        var = jnp.mean(jnp.square(y - mean), axis=-1, keepdims=True)
        return (y - mean) / jnp.sqrt(var + LN_EPS) * g + b

    a = p["alphas"]
    y = x @ p["w1"] + p["b1"]
    y = ln(y, p["g1"], p["be1"])
    y = jnp.where(y >= 0, y, a[0] * y)
    y = y @ p["w2"] + p["b2"]
    y = ln(y, p["g2"], p["be2"])
    y = jnp.where(y >= 0, y, a[1] * y)
    y = y @ p["w3"] + p["b3"]
    return y


if __name__ == "__main__":
    key = jax.random.PRNGKey(0)
    key, xkey, pkey = jax.random.split(key, 3)

    # Ragged N on purpose: exercises the masked edge block (no wrapper pad) and
    # still yields a 2-step grid (tile_n is capped at ~N/2).
    N = 19
    x = jax.random.normal(xkey, (N, C_IN), jnp.float32)
    params = build_params(pkey)

    ref = mymlp_reference(x, params)

    # f32 MXU-input path.
    out = jax.block_until_ready(mymlp_forward(x, params,
                                              compute_dtype=jnp.float32))
    assert out.shape == (N, C_OUT)
    np.testing.assert_allclose(np.asarray(out), np.asarray(ref),
                               rtol=1e-4, atol=1e-4)

    # bf16 MXU-input path (v5e/v6e/v7x-friendly): bf16 operands, f32
    # accumulation, f32 LN/PReLU math.  Loose tolerance (bf16 mantissa).
    out_bf16 = jax.block_until_ready(mymlp_forward(x, params,
                                                   compute_dtype=jnp.bfloat16))
    assert out_bf16.shape == (N, C_OUT)
    assert np.all(np.isfinite(np.asarray(out_bf16)))
    np.testing.assert_allclose(np.asarray(out_bf16), np.asarray(ref),
                               rtol=0.1, atol=0.1)

    print("KERNEL_OK")
</pallas_src>

<mosaic_0001>
module attributes {stable_mosaic.version = 11 : i64} {
  func.func @fused_mlp_kernel(%arg0: i32, %arg1: memref<2xf32, #tpu.memory_space<smem>>, %arg2: memref<16x32xf32, #tpu.memory_space<vmem>>, %arg3: memref<32x64xf32, #tpu.memory_space<vmem>>, %arg4: memref<64x64xf32, #tpu.memory_space<vmem>>, %arg5: memref<64x16xf32, #tpu.memory_space<vmem>>, %arg6: memref<8x128xf32, #tpu.memory_space<vmem>>, %arg7: memref<16x16xf32, #tpu.memory_space<vmem>>) attributes {dimension_semantics = [#tpu.dimension_semantics<parallel>], iteration_bounds = array<i64: 2>, scalar_prefetch = 0 : i64, scratch_operands = 0 : i64, tpu.core_type = #tpu.core_type<tc>, window_params = [{transform_indices = @transform_0, window_bounds = array<i64: 2>}, {transform_indices = @transform_1, window_bounds = array<i64: 16, 32>}, {pipeline_mode = #tpu.pipeline_mode<synchronous>, transform_indices = @transform_2, window_bounds = array<i64: 32, 64>}, {pipeline_mode = #tpu.pipeline_mode<synchronous>, transform_indices = @transform_3, window_bounds = array<i64: 64, 64>}, {pipeline_mode = #tpu.pipeline_mode<synchronous>, transform_indices = @transform_4, window_bounds = array<i64: 64, 16>}, {pipeline_mode = #tpu.pipeline_mode<synchronous>, transform_indices = @transform_5, window_bounds = array<i64: 8, 128>}, {transform_indices = @transform_6, window_bounds = array<i64: 16, 16>}]} {
    %c0 = arith.constant 0 : index
    %c0_0 = arith.constant 0 : index
    %0 = vector.load %arg2[%c0, %c0_0] : memref<16x32xf32, #tpu.memory_space<vmem>>, vector<16x32xf32>
    %c0_1 = arith.constant 0 : index
    %c0_2 = arith.constant 0 : index
    %1 = vector.load %arg3[%c0_1, %c0_2] : memref<32x64xf32, #tpu.memory_space<vmem>>, vector<32x64xf32>
    %cst = arith.constant dense<0.000000e+00> : vector<16x64xf32>
    %2 = tpu.matmul %0, %1, %cst {dimension_numbers = #tpu.dot_dimension_numbers<[1], [0], [0], [1], [0, 0, 1, 1], [], []>} : vector<16x32xf32>, vector<32x64xf32>, vector<16x64xf32> -> vector<16x64xf32>
    %c0_3 = arith.constant 0 : index
    %c0_4 = arith.constant 0 : index
    %3 = vector.load %arg6[%c0_3, %c0_4] : memref<8x128xf32, #tpu.memory_space<vmem>>, vector<1x64xf32>
    %4 = vector.broadcast %3 : vector<1x64xf32> to vector<16x64xf32>
    %5 = arith.addf %2, %4 : vector<16x64xf32>
    %c1 = arith.constant 1 : index
    %c0_5 = arith.constant 0 : index
    %6 = vector.load %arg6[%c1, %c0_5] : memref<8x128xf32, #tpu.memory_space<vmem>>, vector<1x64xf32>
    %c2 = arith.constant 2 : index
    %c0_6 = arith.constant 0 : index
    %7 = vector.load %arg6[%c2, %c0_6] : memref<8x128xf32, #tpu.memory_space<vmem>>, vector<1x64xf32>
    %cst_7 = arith.constant dense<0.000000e+00> : vector<16xf32>
    %8 = vector.multi_reduction <add>, %5, %cst_7 [1] : vector<16x64xf32> to vector<16xf32>
    %9 = vector.shape_cast %8 : vector<16xf32> to vector<16x1xf32>
    %cst_8 = arith.constant 6.400000e+01 : f32
    %10 = vector.broadcast %cst_8 : f32 to vector<16x1xf32>
    %11 = arith.divf %9, %10 : vector<16x1xf32>
    %12 = arith.mulf %5, %5 : vector<16x64xf32>
    %cst_9 = arith.constant dense<0.000000e+00> : vector<16xf32>
    %13 = vector.multi_reduction <add>, %12, %cst_9 [1] : vector<16x64xf32> to vector<16xf32>
    %14 = vector.shape_cast %13 : vector<16xf32> to vector<16x1xf32>
    %cst_10 = arith.constant 6.400000e+01 : f32
    %15 = vector.broadcast %cst_10 : f32 to vector<16x1xf32>
    %16 = arith.divf %14, %15 : vector<16x1xf32>
    %17 = arith.mulf %11, %11 : vector<16x1xf32>
    %18 = arith.subf %16, %17 : vector<16x1xf32>
    %19 = vector.broadcast %11 : vector<16x1xf32> to vector<16x64xf32>
    %20 = arith.subf %5, %19 : vector<16x64xf32>
    %cst_11 = arith.constant 9.99999974E-6 : f32
    %21 = vector.broadcast %cst_11 : f32 to vector<16x1xf32>
    %22 = arith.addf %18, %21 : vector<16x1xf32>
    %23 = math.rsqrt %22 : vector<16x1xf32>
    %24 = vector.broadcast %23 : vector<16x1xf32> to vector<16x64xf32>
    %25 = arith.mulf %20, %24 : vector<16x64xf32>
    %26 = vector.broadcast %6 : vector<1x64xf32> to vector<16x64xf32>
    %27 = arith.mulf %25, %26 : vector<16x64xf32>
    %28 = vector.broadcast %7 : vector<1x64xf32> to vector<16x64xf32>
    %29 = arith.addf %27, %28 : vector<16x64xf32>
    %cst_12 = arith.constant 0.000000e+00 : f32
    %30 = vector.broadcast %cst_12 : f32 to vector<16x64xf32>
    %31 = arith.cmpf oge, %29, %30 : vector<16x64xf32>
    %c0_13 = arith.constant 0 : index
    %32 = memref.load %arg1[%c0_13] : memref<2xf32, #tpu.memory_space<smem>>
    %33 = vector.broadcast %32 : f32 to vector<16x64xf32>
    %34 = arith.mulf %33, %29 : vector<16x64xf32>
    %35 = arith.select %31, %29, %34 : vector<16x64xi1>, vector<16x64xf32>
    %c0_14 = arith.constant 0 : index
    %c0_15 = arith.constant 0 : index
    %36 = vector.load %arg4[%c0_14, %c0_15] : memref<64x64xf32, #tpu.memory_space<vmem>>, vector<64x64xf32>
    %cst_16 = arith.constant dense<0.000000e+00> : vector<16x64xf32>
    %37 = tpu.matmul %35, %36, %cst_16 {dimension_numbers = #tpu.dot_dimension_numbers<[1], [0], [0], [1], [0, 0, 1, 1], [], []>} : vector<16x64xf32>, vector<64x64xf32>, vector<16x64xf32> -> vector<16x64xf32>
    %c3 = arith.constant 3 : index
    %c0_17 = arith.constant 0 : index
    %38 = vector.load %arg6[%c3, %c0_17] : memref<8x128xf32, #tpu.memory_space<vmem>>, vector<1x64xf32>
    %39 = vector.broadcast %38 : vector<1x64xf32> to vector<16x64xf32>
    %40 = arith.addf %37, %39 : vector<16x64xf32>
    %c4 = arith.constant 4 : index
    %c0_18 = arith.constant 0 : index
    %41 = vector.load %arg6[%c4, %c0_18] : memref<8x128xf32, #tpu.memory_space<vmem>>, vector<1x64xf32>
    %c5 = arith.constant 5 : index
    %c0_19 = arith.constant 0 : index
    %42 = vector.load %arg6[%c5, %c0_19] : memref<8x128xf32, #tpu.memory_space<vmem>>, vector<1x64xf32>
    %cst_20 = arith.constant dense<0.000000e+00> : vector<16xf32>
    %43 = vector.multi_reduction <add>, %40, %cst_20 [1] : vector<16x64xf32> to vector<16xf32>
    %44 = vector.shape_cast %43 : vector<16xf32> to vector<16x1xf32>
    %cst_21 = arith.constant 6.400000e+01 : f32
    %45 = vector.broadcast %cst_21 : f32 to vector<16x1xf32>
    %46 = arith.divf %44, %45 : vector<16x1xf32>
    %47 = arith.mulf %40, %40 : vector<16x64xf32>
    %cst_22 = arith.constant dense<0.000000e+00> : vector<16xf32>
    %48 = vector.multi_reduction <add>, %47, %cst_22 [1] : vector<16x64xf32> to vector<16xf32>
    %49 = vector.shape_cast %48 : vector<16xf32> to vector<16x1xf32>
    %cst_23 = arith.constant 6.400000e+01 : f32
    %50 = vector.broadcast %cst_23 : f32 to vector<16x1xf32>
    %51 = arith.divf %49, %50 : vector<16x1xf32>
    %52 = arith.mulf %46, %46 : vector<16x1xf32>
    %53 = arith.subf %51, %52 : vector<16x1xf32>
    %54 = vector.broadcast %46 : vector<16x1xf32> to vector<16x64xf32>
    %55 = arith.subf %40, %54 : vector<16x64xf32>
    %cst_24 = arith.constant 9.99999974E-6 : f32
    %56 = vector.broadcast %cst_24 : f32 to vector<16x1xf32>
    %57 = arith.addf %53, %56 : vector<16x1xf32>
    %58 = math.rsqrt %57 : vector<16x1xf32>
    %59 = vector.broadcast %58 : vector<16x1xf32> to vector<16x64xf32>
    %60 = arith.mulf %55, %59 : vector<16x64xf32>
    %61 = vector.broadcast %41 : vector<1x64xf32> to vector<16x64xf32>
    %62 = arith.mulf %60, %61 : vector<16x64xf32>
    %63 = vector.broadcast %42 : vector<1x64xf32> to vector<16x64xf32>
    %64 = arith.addf %62, %63 : vector<16x64xf32>
    %cst_25 = arith.constant 0.000000e+00 : f32
    %65 = vector.broadcast %cst_25 : f32 to vector<16x64xf32>
    %66 = arith.cmpf oge, %64, %65 : vector<16x64xf32>
    %c1_26 = arith.constant 1 : index
    %67 = memref.load %arg1[%c1_26] : memref<2xf32, #tpu.memory_space<smem>>
    %68 = vector.broadcast %67 : f32 to vector<16x64xf32>
    %69 = arith.mulf %68, %64 : vector<16x64xf32>
    %70 = arith.select %66, %64, %69 : vector<16x64xi1>, vector<16x64xf32>
    %c0_27 = arith.constant 0 : index
    %c0_28 = arith.constant 0 : index
    %71 = vector.load %arg5[%c0_27, %c0_28] : memref<64x16xf32, #tpu.memory_space<vmem>>, vector<64x16xf32>
    %cst_29 = arith.constant dense<0.000000e+00> : vector<16x16xf32>
    %72 = tpu.matmul %70, %71, %cst_29 {dimension_numbers = #tpu.dot_dimension_numbers<[1], [0], [0], [1], [0, 0, 1, 1], [], []>} : vector<16x64xf32>, vector<64x16xf32>, vector<16x16xf32> -> vector<16x16xf32>
    %c6 = arith.constant 6 : index
    %c0_30 = arith.constant 0 : index
    %73 = vector.load %arg6[%c6, %c0_30] : memref<8x128xf32, #tpu.memory_space<vmem>>, vector<1x16xf32>
    %74 = vector.broadcast %73 : vector<1x16xf32> to vector<16x16xf32>
    %75 = arith.addf %72, %74 : vector<16x16xf32>
    %c0_31 = arith.constant 0 : index
    %c0_32 = arith.constant 0 : index
    %76 = vector.load %arg7[%c0_31, %c0_32] : memref<16x16xf32, #tpu.memory_space<vmem>>, vector<16x16xf32>
    tpu.vector_store %arg7[%c0_31, %c0_32], %75 {strides = array<i32>} : memref<16x16xf32, #tpu.memory_space<vmem>>, vector<16x16xf32>,
    return
  }
  func.func @transform_0(%arg0: i32) -> i32 {
    %c0_i32 = arith.constant 0 : i32
    %c0_i32_0 = arith.constant 0 : i32
    return %c0_i32 : i32
  }
  func.func @transform_1(%arg0: i32) -> (i32, i32) {
    %c0_i32 = arith.constant 0 : i32
    %c0_i32_0 = arith.constant 0 : i32
    return %arg0, %c0_i32 : i32, i32
  }
  func.func @transform_2(%arg0: i32) -> (i32, i32) {
    %c0_i32 = arith.constant 0 : i32
    %c0_i32_0 = arith.constant 0 : i32
    %c0_i32_1 = arith.constant 0 : i32
    return %c0_i32, %c0_i32_0 : i32, i32
  }
  func.func @transform_3(%arg0: i32) -> (i32, i32) {
    %c0_i32 = arith.constant 0 : i32
    %c0_i32_0 = arith.constant 0 : i32
    %c0_i32_1 = arith.constant 0 : i32
    return %c0_i32, %c0_i32_0 : i32, i32
  }
  func.func @transform_4(%arg0: i32) -> (i32, i32) {
    %c0_i32 = arith.constant 0 : i32
    %c0_i32_0 = arith.constant 0 : i32
    %c0_i32_1 = arith.constant 0 : i32
    return %c0_i32, %c0_i32_0 : i32, i32
  }
  func.func @transform_5(%arg0: i32) -> (i32, i32) {
    %c0_i32 = arith.constant 0 : i32
    %c0_i32_0 = arith.constant 0 : i32
    %c0_i32_1 = arith.constant 0 : i32
    return %c0_i32, %c0_i32_0 : i32, i32
  }
  func.func @transform_6(%arg0: i32) -> (i32, i32) {
    %c0_i32 = arith.constant 0 : i32
    %c0_i32_0 = arith.constant 0 : i32
    return %arg0, %c0_i32 : i32, i32
  }
}

</mosaic_0001>

<llo_original>
// kernel: tpu_custom_call.1
$region0: #{tpu_custom_call.1}
  #allocation0 [shape = 'u32[]', space=smem, size = 0x4, offset = 0x4, fixed_abs, tag = 'smem constant byte address 0x4 - core index']
  #allocation1 [shape = 'u32[144,128]{1,0:T(1,128)}', space=vmem, size = 0x12000, scoped, tag = 'internal scratch']
  %s0 = inlined_call_operand.vmem [shape: f32[2], index: 0, kind: input, shape index: {}]
  %s1 = inlined_call_operand.vmem [shape: f32[19,32], index: 1, kind: input, shape index: {}]
  %s2 = inlined_call_operand.hbm [shape: f32[32,64], index: 2, kind: input, shape index: {}]
  %s3 = inlined_call_operand.vmem [shape: f32[64,64], index: 3, kind: input, shape index: {}]
  %s4 = inlined_call_operand.vmem [shape: f32[64,16], index: 4, kind: input, shape index: {}]
  %s5 = inlined_call_operand.vmem [shape: f32[8,128], index: 5, kind: input, shape index: {}]
  %s6 = inlined_call_operand.vmem [shape: f32[19,16], index: 6, kind: output, shape index: {}]
  %s7 = sld [smem:[#allocation0]]
  $region113: #{tpu_custom_call.1} parent=0
    _
  %s9 = ssub.s32 1, %s7
  %s10 = scalar_select 0, %s9, %s7
  $region1: #{tpu_custom_call.1} parent=0
    #allocation2 [shape = 'u8[512]{0}', space=smem, size = 0x200, scoped, tag = 'input window, operand 0, single buffered']
    #allocation3 [shape = 's32[2]{0}', space=sflag, size = 0x8, scoped, tag = 'scoped memory for tpu_custom_call.1']
    #allocation4 [shape = 's32[2]{0}', space=sflag, size = 0x8, scoped, tag = 'scoped memory for tpu_custom_call.1']
    #allocation5 [shape = 'u8[16384]{0}', space=vmem, size = 0x4000, scoped, tag = 'input window, operand 2, single buffered']
    #allocation6 [shape = 'u8[16384]{0}', space=vmem, size = 0x4000, scoped, tag = 'output window, operand 0']
    %11 = vsyncpa [#allocation4], 0
    %12 = vsyncpa [#allocation3], 0
    loop: start=0, step=1, limit=4
    $region2: #{tpu_custom_call.1} parent=1 // loop_pre_header
      _
    $region3: #{tpu_custom_call.1} parent=1 // loop_header
      %s14 = sphi 0, %s18
      %p15 = scmp.ge.s32.totalorder %s14, 4
      %s22 = sphi 0, %s22
      %s24 = sphi 0, %s22
      %s25 = sphi 0, %s24
      %s39 = sphi 0, %s25
      %s45 = sphi 0, %s47
      %s48 = sphi 0, %s45
      %s49 = sphi 0, %s48
      %s65 = sphi 0, %s49
      %s69 = sphi 0, %s69
      %s71 = sphi 0, %s69
      %s72 = sphi 0, %s71
      %s86 = sphi 0, %s72
      %s90 = sphi 0, %s90
      %s92 = sphi 0, %s90
      %s93 = sphi 0, %s92
      %s107 = sphi 0, %s93
      %s111 = sphi 0, %s111
      %s113 = sphi 0, %s111
      %s114 = sphi 0, %s113
      %s128 = sphi 0, %s114
      %s132 = sphi 0, %s132
      %s134 = sphi 0, %s132
      %s135 = sphi 0, %s134
      %s149 = sphi 0, %s135
      %s155 = sphi 0, %s157
      %s158 = sphi 0, %s155
      %s159 = sphi 0, %s158
      %s175 = sphi 0, %s159
    $region4: #{tpu_custom_call.1} parent=1 // loop_header_branch
      %17 = sbr.rel (%p15) target = $region8
    $region5: #{tpu_custom_call.1} parent=1 // loop_body
      %s19 = ssub.s32 %s14, 1
      %s20 = ssub.s32 %s14, 2
      %s21 = sadd.s32 %s14, 1
      %s23 = sadd.s32 %s22, 1
      %p26 = scmp.eq.s32.totalorder %s14, 1
      %p27 = scmp.ne.s32.totalorder %s22, %s24
      %p28 = scmp.eq.s32.totalorder %s14, 0
      %p29 = por %p27, %p28
      %p30 = scmp.ne.s32.totalorder %s22, %s24
      %p31 = scmp.eq.s32.totalorder %s19, 1
      %p32 = por %p30, %p31
      %p33 = scmp.ne.s32.totalorder %s24, %s25
      %p34 = scmp.eq.s32.totalorder %s19, 0
      %p35 = por %p33, %p34
      %p36 = scmp.ne.s32.totalorder %s24, %s25
      %p37 = scmp.eq.s32.totalorder %s20, 1
      %p38 = por %p36, %p37
      %p40 = scmp.ne.s32.totalorder %s25, %s39
      %p41 = scmp.eq.s32.totalorder %s20, 0
      %p42 = por %p40, %p41
      %s43 = ssub.s32 %s14, %s21
      %p44 = scmp.eq.s32.totalorder %s43, 0
      %s46 = sadd.s32 %s45, 1
      %s47 = scalar_select %p44, %s45, %s46
      %p50 = pneg %p44
      %p51 = scmp.eq.s32.totalorder %s14, 1
      %p52 = por %p50, %p51
      %p53 = scmp.ne.s32.totalorder %s45, %s48
      %p54 = scmp.eq.s32.totalorder %s14, 0
      %p55 = por %p53, %p54
      %p56 = scmp.ne.s32.totalorder %s45, %s48
      %p57 = scmp.eq.s32.totalorder %s19, 1
      %p58 = por %p56, %p57
      %p59 = scmp.ne.s32.totalorder %s48, %s49
      %p60 = scmp.eq.s32.totalorder %s19, 0
      %p61 = por %p59, %p60
      %p62 = scmp.ne.s32.totalorder %s48, %s49
      %p63 = scmp.eq.s32.totalorder %s20, 1
      %p64 = por %p62, %p63
      %p66 = scmp.ne.s32.totalorder %s49, %s65
      %p67 = scmp.eq.s32.totalorder %s20, 0
      %p68 = por %p66, %p67
      %s70 = sadd.s32 %s69, 1
      %p73 = scmp.eq.s32.totalorder %s14, 1
      %p74 = scmp.ne.s32.totalorder %s69, %s71
      %p75 = scmp.eq.s32.totalorder %s14, 0
      %p76 = por %p74, %p75
      %p77 = scmp.ne.s32.totalorder %s69, %s71
      %p78 = scmp.eq.s32.totalorder %s19, 1
      %p79 = por %p77, %p78
      %p80 = scmp.ne.s32.totalorder %s71, %s72
      %p81 = scmp.eq.s32.totalorder %s19, 0
      %p82 = por %p80, %p81
      %p83 = scmp.ne.s32.totalorder %s71, %s72
      %p84 = scmp.eq.s32.totalorder %s20, 1
      %p85 = por %p83, %p84
      %p87 = scmp.ne.s32.totalorder %s72, %s86
      %p88 = scmp.eq.s32.totalorder %s20, 0
      %p89 = por %p87, %p88
      %s91 = sadd.s32 %s90, 1
      %p94 = scmp.eq.s32.totalorder %s14, 1
      %p95 = scmp.ne.s32.totalorder %s90, %s92
      %p96 = scmp.eq.s32.totalorder %s14, 0
      %p97 = por %p95, %p96
      %p98 = scmp.ne.s32.totalorder %s90, %s92
      %p99 = scmp.eq.s32.totalorder %s19, 1
      %p100 = por %p98, %p99
      %p101 = scmp.ne.s32.totalorder %s92, %s93
      %p102 = scmp.eq.s32.totalorder %s19, 0
      %p103 = por %p101, %p102
      %p104 = scmp.ne.s32.totalorder %s92, %s93
      %p105 = scmp.eq.s32.totalorder %s20, 1
      %p106 = por %p104, %p105
      %p108 = scmp.ne.s32.totalorder %s93, %s107
      %p109 = scmp.eq.s32.totalorder %s20, 0
      %p110 = por %p108, %p109
      %s112 = sadd.s32 %s111, 1
      %p115 = scmp.eq.s32.totalorder %s14, 1
      %p116 = scmp.ne.s32.totalorder %s111, %s113
      %p117 = scmp.eq.s32.totalorder %s14, 0
      %p118 = por %p116, %p117
      %p119 = scmp.ne.s32.totalorder %s111, %s113
      %p120 = scmp.eq.s32.totalorder %s19, 1
      %p121 = por %p119, %p120
      %p122 = scmp.ne.s32.totalorder %s113, %s114
      %p123 = scmp.eq.s32.totalorder %s19, 0
      %p124 = por %p122, %p123
      %p125 = scmp.ne.s32.totalorder %s113, %s114
      %p126 = scmp.eq.s32.totalorder %s20, 1
      %p127 = por %p125, %p126
      %p129 = scmp.ne.s32.totalorder %s114, %s128
      %p130 = scmp.eq.s32.totalorder %s20, 0
      %p131 = por %p129, %p130
      %s133 = sadd.s32 %s132, 1
      %p136 = scmp.eq.s32.totalorder %s14, 1
      %p137 = scmp.ne.s32.totalorder %s132, %s134
      %p138 = scmp.eq.s32.totalorder %s14, 0
      %p139 = por %p137, %p138
      %p140 = scmp.ne.s32.totalorder %s132, %s134
      %p141 = scmp.eq.s32.totalorder %s19, 1
      %p142 = por %p140, %p141
      %p143 = scmp.ne.s32.totalorder %s134, %s135
      %p144 = scmp.eq.s32.totalorder %s19, 0
      %p145 = por %p143, %p144
      %p146 = scmp.ne.s32.totalorder %s134, %s135
      %p147 = scmp.eq.s32.totalorder %s20, 1
      %p148 = por %p146, %p147
      %p150 = scmp.ne.s32.totalorder %s135, %s149
      %p151 = scmp.eq.s32.totalorder %s20, 0
      %p152 = por %p150, %p151
      %s153 = ssub.s32 %s14, %s21
      %p154 = scmp.eq.s32.totalorder %s153, 0
      %s156 = sadd.s32 %s155, 1
      %s157 = scalar_select %p154, %s155, %s156
      %p160 = pneg %p154
      %p161 = scmp.eq.s32.totalorder %s14, 1
      %p162 = por %p160, %p161
      %p163 = scmp.ne.s32.totalorder %s155, %s158
      %p164 = scmp.eq.s32.totalorder %s14, 0
      %p165 = por %p163, %p164
      %p166 = scmp.ne.s32.totalorder %s155, %s158
      %p167 = scmp.eq.s32.totalorder %s19, 1
      %p168 = por %p166, %p167
      %p169 = scmp.ne.s32.totalorder %s158, %s159
      %p170 = scmp.eq.s32.totalorder %s19, 0
      %p171 = por %p169, %p170
      %p172 = scmp.ne.s32.totalorder %s158, %s159
      %p173 = scmp.eq.s32.totalorder %s20, 1
      %p174 = por %p172, %p173
      %p176 = scmp.ne.s32.totalorder %s159, %s175
      %p177 = scmp.eq.s32.totalorder %s20, 0
      %p178 = por %p176, %p177
      %p179 = scmp.le.s32.totalorder 1, %s14
      %p180 = scmp.lt.s32.totalorder %s14, 3
      %p181 = pnand %p179, %p180
      %p182 = pneg %p181
      // Predicated region
      $region9: #{tpu_custom_call.1} parent=5 // pred_check
        _
      $region10: #{tpu_custom_call.1} parent=5 // pred_check_branch
        %184 = sbr.rel (%p181) target = $region12
      $region11: #{tpu_custom_call.1} parent=5 // pred_region
        %s185 = ssub.s32 %s14, 1
        // Predicated region
        $region13: #{tpu_custom_call.1} parent=11 // pred_check
          %p186 = pneg %p35
        $region14: #{tpu_custom_call.1} parent=11 // pred_check_branch
          %188 = sbr.rel (%p186) target = $region16
        $region15: #{tpu_custom_call.1} parent=11 // pred_region
          %s190 = ssub.s32 16, 16
          %191 = vsyncadd [#allocation4], %s190
          %s193 = sshll.u32 %s0, 4
          %s194 = int_to_ptr.vmem [resolvable:$true] %s193
          %196 = dma.vmem_to_smem %s194, 16, [#allocation2], [#allocation4]
        $region16: #{tpu_custom_call.1} parent=11 // pred_fallthru
          _
        // Predicated region
        $region17: #{tpu_custom_call.1} parent=11 // pred_check
          %p197 = pneg %p82
        $region18: #{tpu_custom_call.1} parent=11 // pred_check_branch
          %199 = sbr.rel (%p197) target = $region20
        $region19: #{tpu_custom_call.1} parent=11 // pred_region
          %s201 = ssub.s32 512, 512
          %202 = vsyncadd [#allocation3], %s201
          %s203 = sshll.u32 [#allocation5], 4
          %s204 = int_to_ptr.vmem [resolvable:$true] %s203
          %209 = dma.hbm_to_vmem [thread:$0]  %s2, 512, %s204, [#allocation3], 128, 128, 8
        $region20: #{tpu_custom_call.1} parent=11 // pred_fallthru
          _
        // Predicated region
        $region21: #{tpu_custom_call.1} parent=11 // pred_check
          %p210 = pneg %p103
        $region22: #{tpu_custom_call.1} parent=11 // pred_check_branch
          %212 = sbr.rel (%p210) target = $region24
        $region23: #{tpu_custom_call.1} parent=11 // pred_region
          _
        $region24: #{tpu_custom_call.1} parent=11 // pred_fallthru
          _
        // Predicated region
        $region25: #{tpu_custom_call.1} parent=11 // pred_check
          %p213 = pneg %p124
        $region26: #{tpu_custom_call.1} parent=11 // pred_check_branch
          %215 = sbr.rel (%p213) target = $region28
        $region27: #{tpu_custom_call.1} parent=11 // pred_region
          _
        $region28: #{tpu_custom_call.1} parent=11 // pred_fallthru
          _
        // Predicated region
        $region29: #{tpu_custom_call.1} parent=11 // pred_check
          %p216 = pneg %p145
        $region30: #{tpu_custom_call.1} parent=11 // pred_check_branch
          %218 = sbr.rel (%p216) target = $region32
        $region31: #{tpu_custom_call.1} parent=11 // pred_region
          _
        $region32: #{tpu_custom_call.1} parent=11 // pred_fallthru
          _
      $region12: #{tpu_custom_call.1} parent=5 // pred_fallthru
        _
      %p219 = scmp.lt.s32.totalorder %s14, 2
      // Predicated region
      $region33: #{tpu_custom_call.1} parent=5 // pred_check
        %p220 = pneg %p219
      $region34: #{tpu_custom_call.1} parent=5 // pred_check_branch
        %222 = sbr.rel (%p220) target = $region36
      $region35: #{tpu_custom_call.1} parent=5 // pred_region
        // Predicated region
        $region37: #{tpu_custom_call.1} parent=35 // pred_check
          %p223 = pneg %p55
        $region38: #{tpu_custom_call.1} parent=35 // pred_check_branch
          %225 = sbr.rel (%p223) target = $region40
        $region39: #{tpu_custom_call.1} parent=35 // pred_region
          %s226 = smul.u32 2, %s14
          %s227 = ssub.s32 3, %s226
          %p228 = scmp.lt.s32.totalorder %s227, 2
          %s229 = scalar_select %p228, %s227, 2
          %s230 = smul.u32 128, %s229
          %p231 = scmp.lt.s32.totalorder %s226, 2
          %s232 = scalar_select %p231, %s226, 2
          %s233 = smul.addr %s232, 8
          %s234 = scalar_lea.vmem %s1, %s233
          %s235 = smul.u32 2, %s14
          %s236 = ssub.s32 3, %s235
          %p237 = scmp.lt.s32.totalorder %s236, 2
          %s238 = scalar_select %p237, %s236, 2
          %s239 = smul.u32 128, %s238
        $region40: #{tpu_custom_call.1} parent=35 // pred_fallthru
          _
      $region36: #{tpu_custom_call.1} parent=5 // pred_fallthru
        _
      %p240 = scmp.le.s32.totalorder 1, %s14
      %p241 = scmp.lt.s32.totalorder %s14, 3
      %p242 = pnand %p240, %p241
      %p243 = pneg %p242
      // Predicated region
      $region41: #{tpu_custom_call.1} parent=5 // pred_check
        _
      $region42: #{tpu_custom_call.1} parent=5 // pred_check_branch
        %245 = sbr.rel (%p242) target = $region44
      $region43: #{tpu_custom_call.1} parent=5 // pred_region
        %s246 = ssub.s32 %s14, 1
        // Predicated region
        $region45: #{tpu_custom_call.1} parent=43 // pred_check
          %p247 = pneg %p35
        $region46: #{tpu_custom_call.1} parent=43 // pred_check_branch
          %249 = sbr.rel (%p247) target = $region48
        $region47: #{tpu_custom_call.1} parent=43 // pred_region
          %250 = dma.done [#allocation4], 16
        $region48: #{tpu_custom_call.1} parent=43 // pred_fallthru
          _
        // Predicated region
        $region49: #{tpu_custom_call.1} parent=43 // pred_check
          %p251 = pneg %p82
        $region50: #{tpu_custom_call.1} parent=43 // pred_check_branch
          %253 = sbr.rel (%p251) target = $region52
        $region51: #{tpu_custom_call.1} parent=43 // pred_region
          %254 = dma.done [#allocation3], 512
        $region52: #{tpu_custom_call.1} parent=43 // pred_fallthru
          _
        %255 = sfence
        %p256 = pneg %p35
        %p257 = pneg %p32
        %s258 = smul.u32 2, %s19
        %s259 = ssub.s32 3, %s258
        %p260 = scmp.lt.s32.totalorder %s259, 2
        %s261 = scalar_select %p260, %s259, 2
        %s262 = smul.u32 128, %s261
        %p263 = scmp.lt.s32.totalorder %s258, 2
        %s264 = scalar_select %p263, %s258, 2
        %s265 = smul.addr %s264, 8
        %s266 = scalar_lea.vmem %s1, %s265
        %p267 = pneg %p61
        %p268 = pneg %p58
        %p269 = pneg %p82
        %p270 = pneg %p79
        %p271 = pneg %p103
        %p272 = pneg %p100
        %p273 = pneg %p124
        %p274 = pneg %p121
        %p275 = pneg %p145
        %p276 = pneg %p142
        %p277 = pneg %p171
        %p278 = pneg %p168
        %s279 = sand.u32 %s158, 1
        %s280 = sand.u32 %s158, 1
        %s281 = smul.addr %s280, 16
        %s282 = scalar_lea.vmem [#allocation6], %s281
        %s283 = smul.u32 2, %s19
        %s284 = ssub.s32 3, %s283
        %p285 = scmp.lt.s32.totalorder %s284, 2
        %s286 = scalar_select %p285, %s284, 2
        %s287 = smul.u32 128, %s286
        %p288 = scmp.lt.s32.totalorder %s283, 2
        %s289 = scalar_select %p288, %s283, 2
        %s290 = smul.addr %s289, 8
        %s291 = scalar_lea.vmem %s1, %s290
        %s292 = smul.u32 2, %s19
        %s293 = ssub.s32 3, %s292
        %p294 = scmp.lt.s32.totalorder %s293, 2
        %s295 = scalar_select %p294, %s293, 2
        %s296 = smul.u32 128, %s295
        %s297 = smul.u32 2, %s19
        %s298 = ssub.s32 3, %s297
        %p299 = scmp.lt.s32.totalorder %s298, 2
        %s300 = scalar_select %p299, %s298, 2
        %s301 = smul.u32 128, %s300
        %v302 = vld [vmem:[%s291] sm:$0xff]
        %v303 = vld [vmem:[%s291 + $0x8] sm:$0xff]
        %v304 = vld [vmem:[#allocation5] sm:$0xff]
        %v305 = vld [vmem:[#allocation5 + $0x8] sm:$0xff]
        %v306 = vld [vmem:[#allocation5 + $0x10] sm:$0xff]
        %v307 = vld [vmem:[#allocation5 + $0x18] sm:$0xff]
        %v308 = vld [vmem:[%s5] sm:$0x1]
        %v309 = vlaneseq
        %v310 = vshrl.u32 %v309, 7
        %v311 = vsub.s32 0, %v310
        %v312 = vrot.slane %v308, %v311
        %vm313 = vcmask 261120
        %v315 = vsel %vm313, %v302, 0
        %v318 = vsel %vm313, %v303, 0
        %320 = vmatprep.subr.mxu0 0.0
        %321 = vmatpush1.msra.mxu0 %v304
        %322 = vmatprep.subr.mxu0 0.0
        %323 = vmatpush1.msra.mxu0 %v305
        %324 = vmatprep.subr.mxu0 0.0
        %325 = vmatpush1.msra.mxu0 %v306
        %326 = vmatprep.subr.mxu0 0.0
        %327 = vmatpush1.msra.mxu0 %v307
        %328 = vmatprep.subr.mxu0 0.0
        %329 = vmatpush1.msra.mxu0 0.0
        %330 = vmatprep.subr.mxu0 0.0
        %331 = vmatpush1.msra.mxu0 0.0
        %332 = vmatprep.subr.mxu0 0.0
        %333 = vmatpush1.msra.mxu0 0.0
        %334 = vmatprep.subr.mxu0 0.0
        %335 = vmatpush1.msra.mxu0 0.0
        %336 = vmatprep.subr.mxu0 0.0
        %337 = vmatpush1.msra.mxu0 0.0
        %338 = vmatprep.subr.mxu0 0.0
        %339 = vmatpush1.msra.mxu0 0.0
        %340 = vmatprep.subr.mxu0 0.0
        %341 = vmatpush1.msra.mxu0 0.0
        %342 = vmatprep.subr.mxu0 0.0
        %343 = vmatpush1.msra.mxu0 0.0
        %344 = vmatprep.subr.mxu0 0.0
        %345 = vmatpush1.msra.mxu0 0.0
        %346 = vmatprep.subr.mxu0 0.0
        %347 = vmatpush1.msra.mxu0 0.0
        %348 = vmatprep.subr.mxu0 0.0
        %349 = vmatpush1.msra.mxu0 0.0
        %350 = vmatprep.subr.mxu0 0.0
        %351 = vmatpush1.msra.mxu0 0.0
        %352 = vmatprep.subr.mxu0 0.0
        %353 = vmatpush1.msra.mxu0 0.0
        %354 = vmatprep.subr.mxu0 0.0
        %355 = vmatpush1.msra.mxu0 0.0
        %356 = vmatprep.subr.mxu0 0.0
        %357 = vmatpush1.msra.mxu0 0.0
        %358 = vmatprep.subr.mxu0 0.0
        %359 = vmatpush1.msra.mxu0 0.0
        %360 = vmatprep.subr.mxu0 0.0
        %361 = vmatpush1.msra.mxu0 0.0
        %362 = vmatprep.subr.mxu0 0.0
        %363 = vmatpush1.msra.mxu0 0.0
        %364 = vmatprep.subr.mxu0 0.0
        %365 = vmatpush1.msra.mxu0 0.0
        %366 = vmatprep.subr.mxu0 0.0
        %367 = vmatpush1.msra.mxu0 0.0
        %368 = vmatprep.subr.mxu0 0.0
        %369 = vmatpush1.msra.mxu0 0.0
        %370 = vmatprep.subr.mxu0 0.0
        %371 = vmatpush1.msra.mxu0 0.0
        %372 = vmatprep.subr.mxu0 0.0
        %373 = vmatpush1.msra.mxu0 0.0
        %374 = vmatprep.subr.mxu0 0.0
        %375 = vmatpush1.msra.mxu0 0.0
        %376 = vmatprep.subr.mxu0 0.0
        %377 = vmatpush1.msra.mxu0 0.0
        %378 = vmatprep.subr.mxu0 0.0
        %379 = vmatpush1.msra.mxu0 0.0
        %380 = vmatprep.subr.mxu0 0.0
        %381 = vmatpush1.msra.mxu0 0.0
        %382 = vmatprep.subr.mxu0 0.0
        %383 = vmatpush1.msra.mxu0 0.0
        %384 = vmatprep.mubr.f32.mxu0 0.0
        %385 = vmatmul.mubr.f32.gmra.mrb[0].mxu0 %v315
        %v386 = vpop.f32.mrb[0].mxu0
        %v387 = vadd.f32 %v312, %v386
        %v388 = vpop.f32.mrb[0].mxu0
        %389 = vmatprep.mubr.f32.mxu0 0.0
        %390 = vmatmul.mubr.f32.gmra.mrb[0].mxu0 %v318
        %v391 = vpop.f32.mrb[0].mxu0
        %v392 = vadd.f32 %v312, %v391
        %v393 = vpop.f32.mrb[0].mxu0
        %394 = vdwg.mxu0
        %v395 = vld [vmem:[%s5 + $0x1] sm:$0x1]
        %v396 = vld [vmem:[%s5 + $0x2] sm:$0x1]
        %vm397 = vcmask 523264
        %v398 = vsel %vm397, %v387, 0.0
        %399 = vadd.xlane.f32.xlu0 %v398
        %v400 = vpop.xlane.xlu0 %399
        %v401 = vsel %vm397, %v392, 0.0
        %402 = vadd.xlane.f32.xlu0 %v401
        %v403 = vpop.xlane.xlu0 %402
        %v404 = vrcp.pop 64.0
        %v405 = vmul.f32 %v400, %v404
        %v406 = vmul.f32 %v403, %v404
        %v407 = vmul.f32 %v387, %v387
        %v408 = vmul.f32 %v392, %v392
        %v409 = vsel %vm397, %v407, 0.0
        %410 = vadd.xlane.f32.xlu0 %v409
        %v411 = vpop.xlane.xlu0 %410
        %v412 = vsel %vm397, %v408, 0.0
        %413 = vadd.xlane.f32.xlu0 %v412
        %v414 = vpop.xlane.xlu0 %413
        %v415 = vmul.f32 %v411, %v404
        %v416 = vmul.f32 %v414, %v404
        %v417 = vmul.f32 %v405, %v405
        %v418 = vmul.f32 %v406, %v406
        %v419 = vsub.f32 %v415, %v417
        %v420 = vsub.f32 %v416, %v418
        %v421 = vsub.f32 %v387, %v405
        %v422 = vsub.f32 %v392, %v406
        %v423 = vadd.f32 %v419, 1e-05
        %v424 = vadd.f32 %v420, 1e-05
        %v425 = vrsqrt.pop %v423
        %v426 = vrsqrt.pop %v424
        %v427 = vmul.f32 %v421, %v425
        %v428 = vmul.f32 %v422, %v426
        %v429 = vlaneseq
        %v430 = vshrl.u32 %v429, 7
        %v431 = vsub.s32 0, %v430
        %v432 = vrot.slane %v395, %v431
        %v433 = vmul.f32 %v427, %v432
        %v434 = vmul.f32 %v428, %v432
        %v435 = vlaneseq
        %v436 = vshrl.u32 %v435, 7
        %v437 = vsub.s32 0, %v436
        %v438 = vrot.slane %v396, %v437
        %v439 = vadd.f32 %v433, %v438
        %v440 = vadd.f32 %v434, %v438
        %vm441 = vcmp.ge.f32.partialorder %v439, 0.0
        %vm442 = vcmp.ge.f32.partialorder %v440, 0.0
        %s443 = sld [smem:[#allocation2]]
        %v444 = vstv %s443
        %v445 = vmul.f32 %v444, %v439
        %v446 = vmul.f32 %v444, %v440
        %v447 = vsel %vm441, %v439, %v445
        %v448 = vsel %vm442, %v440, %v446
        %v449 = vld [vmem:[%s3] sm:$0xff]
        %v450 = vld [vmem:[%s3 + $0x8] sm:$0xff]
        %v451 = vld [vmem:[%s3 + $0x10] sm:$0xff]
        %v452 = vld [vmem:[%s3 + $0x18] sm:$0xff]
        %v453 = vld [vmem:[%s3 + $0x20] sm:$0xff]
        %v454 = vld [vmem:[%s3 + $0x28] sm:$0xff]
        %v455 = vld [vmem:[%s3 + $0x30] sm:$0xff]
        %v456 = vld [vmem:[%s3 + $0x38] sm:$0xff]
        %v457 = vld [vmem:[%s5 + $0x3] sm:$0x1]
        %v458 = vlaneseq
        %v459 = vshrl.u32 %v458, 7
        %v460 = vsub.s32 0, %v459
        %v461 = vrot.slane %v457, %v460
        %v463 = vsel %vm397, %v447, 0
        %v466 = vsel %vm397, %v448, 0
        %468 = vmatprep.subr.mxu0 0.0
        %469 = vmatpush1.msra.mxu0 %v449
        %470 = vmatprep.subr.mxu0 0.0
        %471 = vmatpush1.msra.mxu0 %v450
        %472 = vmatprep.subr.mxu0 0.0
        %473 = vmatpush1.msra.mxu0 %v451
        %474 = vmatprep.subr.mxu0 0.0
        %475 = vmatpush1.msra.mxu0 %v452
        %476 = vmatprep.subr.mxu0 0.0
        %477 = vmatpush1.msra.mxu0 %v453
        %478 = vmatprep.subr.mxu0 0.0
        %479 = vmatpush1.msra.mxu0 %v454
        %480 = vmatprep.subr.mxu0 0.0
        %481 = vmatpush1.msra.mxu0 %v455
        %482 = vmatprep.subr.mxu0 0.0
        %483 = vmatpush1.msra.mxu0 %v456
        %484 = vmatprep.subr.mxu0 0.0
        %485 = vmatpush1.msra.mxu0 0.0
        %486 = vmatprep.subr.mxu0 0.0
        %487 = vmatpush1.msra.mxu0 0.0
        %488 = vmatprep.subr.mxu0 0.0
        %489 = vmatpush1.msra.mxu0 0.0
        %490 = vmatprep.subr.mxu0 0.0
        %491 = vmatpush1.msra.mxu0 0.0
        %492 = vmatprep.subr.mxu0 0.0
        %493 = vmatpush1.msra.mxu0 0.0
        %494 = vmatprep.subr.mxu0 0.0
        %495 = vmatpush1.msra.mxu0 0.0
        %496 = vmatprep.subr.mxu0 0.0
        %497 = vmatpush1.msra.mxu0 0.0
        %498 = vmatprep.subr.mxu0 0.0
        %499 = vmatpush1.msra.mxu0 0.0
        %500 = vmatprep.subr.mxu0 0.0
        %501 = vmatpush1.msra.mxu0 0.0
        %502 = vmatprep.subr.mxu0 0.0
        %503 = vmatpush1.msra.mxu0 0.0
        %504 = vmatprep.subr.mxu0 0.0
        %505 = vmatpush1.msra.mxu0 0.0
        %506 = vmatprep.subr.mxu0 0.0
        %507 = vmatpush1.msra.mxu0 0.0
        %508 = vmatprep.subr.mxu0 0.0
        %509 = vmatpush1.msra.mxu0 0.0
        %510 = vmatprep.subr.mxu0 0.0
        %511 = vmatpush1.msra.mxu0 0.0
        %512 = vmatprep.subr.mxu0 0.0
        %513 = vmatpush1.msra.mxu0 0.0
        %514 = vmatprep.subr.mxu0 0.0
        %515 = vmatpush1.msra.mxu0 0.0
        %516 = vmatprep.subr.mxu0 0.0
        %517 = vmatpush1.msra.mxu0 0.0
        %518 = vmatprep.subr.mxu0 0.0
        %519 = vmatpush1.msra.mxu0 0.0
        %520 = vmatprep.subr.mxu0 0.0
        %521 = vmatpush1.msra.mxu0 0.0
        %522 = vmatprep.subr.mxu0 0.0
        %523 = vmatpush1.msra.mxu0 0.0
        %524 = vmatprep.subr.mxu0 0.0
        %525 = vmatpush1.msra.mxu0 0.0
        %526 = vmatprep.subr.mxu0 0.0
        %527 = vmatpush1.msra.mxu0 0.0
        %528 = vmatprep.subr.mxu0 0.0
        %529 = vmatpush1.msra.mxu0 0.0
        %530 = vmatprep.subr.mxu0 0.0
        %531 = vmatpush1.msra.mxu0 0.0
        %532 = vmatprep.mubr.f32.mxu0 0.0
        %533 = vmatmul.mubr.f32.gmra.mrb[0].mxu0 %v463
        %v534 = vpop.f32.mrb[0].mxu0
        %v535 = vadd.f32 %v461, %v534
        %v536 = vpop.f32.mrb[0].mxu0
        %537 = vmatprep.mubr.f32.mxu0 0.0
        %538 = vmatmul.mubr.f32.gmra.mrb[0].mxu0 %v466
        %v539 = vpop.f32.mrb[0].mxu0
        %v540 = vadd.f32 %v461, %v539
        %v541 = vpop.f32.mrb[0].mxu0
        %542 = vdwg.mxu0
        %v543 = vld [vmem:[%s5 + $0x4] sm:$0x1]
        %v544 = vld [vmem:[%s5 + $0x5] sm:$0x1]
        %v545 = vsel %vm397, %v535, 0.0
        %546 = vadd.xlane.f32.xlu0 %v545
        %v547 = vpop.xlane.xlu0 %546
        %v548 = vsel %vm397, %v540, 0.0
        %549 = vadd.xlane.f32.xlu0 %v548
        %v550 = vpop.xlane.xlu0 %549
        %v551 = vmul.f32 %v547, %v404
        %v552 = vmul.f32 %v550, %v404
        %v553 = vmul.f32 %v535, %v535
        %v554 = vmul.f32 %v540, %v540
        %v555 = vsel %vm397, %v553, 0.0
        %556 = vadd.xlane.f32.xlu0 %v555
        %v557 = vpop.xlane.xlu0 %556
        %v558 = vsel %vm397, %v554, 0.0
        %559 = vadd.xlane.f32.xlu0 %v558
        %v560 = vpop.xlane.xlu0 %559
        %v561 = vmul.f32 %v557, %v404
        %v562 = vmul.f32 %v560, %v404
        %v563 = vmul.f32 %v551, %v551
        %v564 = vmul.f32 %v552, %v552
        %v565 = vsub.f32 %v561, %v563
        %v566 = vsub.f32 %v562, %v564
        %v567 = vsub.f32 %v535, %v551
        %v568 = vsub.f32 %v540, %v552
        %v569 = vadd.f32 %v565, 1e-05
        %v570 = vadd.f32 %v566, 1e-05
        %v571 = vrsqrt.pop %v569
        %v572 = vrsqrt.pop %v570
        %v573 = vmul.f32 %v567, %v571
        %v574 = vmul.f32 %v568, %v572
        %v575 = vlaneseq
        %v576 = vshrl.u32 %v575, 7
        %v577 = vsub.s32 0, %v576
        %v578 = vrot.slane %v543, %v577
        %v579 = vmul.f32 %v573, %v578
        %v580 = vmul.f32 %v574, %v578
        %v581 = vlaneseq
        %v582 = vshrl.u32 %v581, 7
        %v583 = vsub.s32 0, %v582
        %v584 = vrot.slane %v544, %v583
        %v585 = vadd.f32 %v579, %v584
        %v586 = vadd.f32 %v580, %v584
        %vm587 = vcmp.ge.f32.partialorder %v585, 0.0
        %vm588 = vcmp.ge.f32.partialorder %v586, 0.0
        %s589 = sld [smem:[#allocation2 + $0x1]]
        %v590 = vstv %s589
        %v591 = vmul.f32 %v590, %v585
        %v592 = vmul.f32 %v590, %v586
        %v593 = vsel %vm587, %v585, %v591
        %v594 = vsel %vm588, %v586, %v592
        %v595 = vld [vmem:[%s4] sm:$0xff]
        %v596 = vld [vmem:[%s4 + $0x8] sm:$0xff]
        %v597 = vld [vmem:[%s4 + $0x10] sm:$0xff]
        %v598 = vld [vmem:[%s4 + $0x18] sm:$0xff]
        %v599 = vld [vmem:[%s4 + $0x20] sm:$0xff]
        %v600 = vld [vmem:[%s4 + $0x28] sm:$0xff]
        %v601 = vld [vmem:[%s4 + $0x30] sm:$0xff]
        %v602 = vld [vmem:[%s4 + $0x38] sm:$0xff]
        %v603 = vld [vmem:[%s5 + $0x6] sm:$0x1]
        %v604 = vlaneseq
        %v605 = vshrl.u32 %v604, 7
        %v606 = vsub.s32 0, %v605
        %v607 = vrot.slane %v603, %v606
        %v609 = vsel %vm397, %v593, 0
        %v612 = vsel %vm397, %v594, 0
        %614 = vmatprep.subr.mxu0 0.0
        %615 = vmatpush1.msra.mxu0 %v595
        %616 = vmatprep.subr.mxu0 0.0
        %617 = vmatpush1.msra.mxu0 %v596
        %618 = vmatprep.subr.mxu0 0.0
        %619 = vmatpush1.msra.mxu0 %v597
        %620 = vmatprep.subr.mxu0 0.0
        %621 = vmatpush1.msra.mxu0 %v598
        %622 = vmatprep.subr.mxu0 0.0
        %623 = vmatpush1.msra.mxu0 %v599
        %624 = vmatprep.subr.mxu0 0.0
        %625 = vmatpush1.msra.mxu0 %v600
        %626 = vmatprep.subr.mxu0 0.0
        %627 = vmatpush1.msra.mxu0 %v601
        %628 = vmatprep.subr.mxu0 0.0
        %629 = vmatpush1.msra.mxu0 %v602
        %630 = vmatprep.subr.mxu0 0.0
        %631 = vmatpush1.msra.mxu0 0.0
        %632 = vmatprep.subr.mxu0 0.0
        %633 = vmatpush1.msra.mxu0 0.0
        %634 = vmatprep.subr.mxu0 0.0
        %635 = vmatpush1.msra.mxu0 0.0
        %636 = vmatprep.subr.mxu0 0.0
        %637 = vmatpush1.msra.mxu0 0.0
        %638 = vmatprep.subr.mxu0 0.0
        %639 = vmatpush1.msra.mxu0 0.0
        %640 = vmatprep.subr.mxu0 0.0
        %641 = vmatpush1.msra.mxu0 0.0
        %642 = vmatprep.subr.mxu0 0.0
        %643 = vmatpush1.msra.mxu0 0.0
        %644 = vmatprep.subr.mxu0 0.0
        %645 = vmatpush1.msra.mxu0 0.0
        %646 = vmatprep.subr.mxu0 0.0
        %647 = vmatpush1.msra.mxu0 0.0
        %648 = vmatprep.subr.mxu0 0.0
        %649 = vmatpush1.msra.mxu0 0.0
        %650 = vmatprep.subr.mxu0 0.0
        %651 = vmatpush1.msra.mxu0 0.0
        %652 = vmatprep.subr.mxu0 0.0
        %653 = vmatpush1.msra.mxu0 0.0
        %654 = vmatprep.subr.mxu0 0.0
        %655 = vmatpush1.msra.mxu0 0.0
        %656 = vmatprep.subr.mxu0 0.0
        %657 = vmatpush1.msra.mxu0 0.0
        %658 = vmatprep.subr.mxu0 0.0
        %659 = vmatpush1.msra.mxu0 0.0
        %660 = vmatprep.subr.mxu0 0.0
        %661 = vmatpush1.msra.mxu0 0.0
        %662 = vmatprep.subr.mxu0 0.0
        %663 = vmatpush1.msra.mxu0 0.0
        %664 = vmatprep.subr.mxu0 0.0
        %665 = vmatpush1.msra.mxu0 0.0
        %666 = vmatprep.subr.mxu0 0.0
        %667 = vmatpush1.msra.mxu0 0.0
        %668 = vmatprep.subr.mxu0 0.0
        %669 = vmatpush1.msra.mxu0 0.0
        %670 = vmatprep.subr.mxu0 0.0
        %671 = vmatpush1.msra.mxu0 0.0
        %672 = vmatprep.subr.mxu0 0.0
        %673 = vmatpush1.msra.mxu0 0.0
        %674 = vmatprep.subr.mxu0 0.0
        %675 = vmatpush1.msra.mxu0 0.0
        %676 = vmatprep.subr.mxu0 0.0
        %677 = vmatpush1.msra.mxu0 0.0
        %678 = vmatprep.mubr.f32.mxu0 0.0
        %679 = vmatmul.mubr.f32.gmra.mrb[0].mxu0 %v609
        %v680 = vpop.f32.mrb[0].mxu0
        %v681 = vadd.f32 %v607, %v680
        %v682 = vpop.f32.mrb[0].mxu0
        %683 = vmatprep.mubr.f32.mxu0 0.0
        %684 = vmatmul.mubr.f32.gmra.mrb[0].mxu0 %v612
        %v685 = vpop.f32.mrb[0].mxu0
        %v686 = vadd.f32 %v607, %v685
        %v687 = vpop.f32.mrb[0].mxu0
        %688 = vdwg.mxu0
        %vm689 = vcmask 130048
        %690 = vst.msk [vmem:[%s282] sm:$0xff] %vm689, %v681
        %691 = vst.msk [vmem:[%s282 + $0x8] sm:$0xff] %vm689, %v686
        %s692 = sand.u32 %s158, 1
        %s693 = sand.u32 %s158, 1
        %s694 = smul.addr %s693, 16
        %s695 = scalar_lea.vmem [#allocation6], %s694
        // Predicated region
        $region53: #{tpu_custom_call.1} parent=43 // pred_check
          %p696 = pneg %p168
        $region54: #{tpu_custom_call.1} parent=43 // pred_check_branch
          %698 = sbr.rel (%p696) target = $region56
        $region55: #{tpu_custom_call.1} parent=43 // pred_region
          %s699 = smul.u32 2, %s19
          %s700 = ssub.s32 3, %s699
          %p701 = scmp.lt.s32.totalorder %s700, 2
          %s702 = scalar_select %p701, %s700, 2
          %s703 = smul.u32 128, %s702
          %p704 = scmp.ne.s32.totalorder 0, %s703
          %s705 = smul.addr %s699, 8
          %s706 = scalar_lea.vmem %s6, %s705
          // Predicated region
          $region57: #{tpu_custom_call.1} parent=55 // pred_check
            %p707 = pneg %p704
          $region58: #{tpu_custom_call.1} parent=55 // pred_check_branch
            %709 = sbr.rel (%p707) target = $region60
          $region59: #{tpu_custom_call.1} parent=55 // pred_region
            // Predicated region
            $region61: #{tpu_custom_call.1} parent=59 // pred_check
              _
            $region62: #{tpu_custom_call.1} parent=59 // pred_check_branch
              %711 = sbr.rel (0) target = $region64
            $region63: #{tpu_custom_call.1} parent=59 // pred_region
              // Predicated region
              $region83: #{tpu_custom_call.1} parent=63 // pred_check
                _
              $region84: #{tpu_custom_call.1} parent=63 // pred_check_branch
                %762 = sbr.rel (0) target = $region86
              $region85: #{tpu_custom_call.1} parent=63 // pred_region
                %s763 = sshrl.u32 %s702, 1
                // While loop
                $region87: #{tpu_custom_call.1} parent=85 // loop_pre_header
                  _
                $region88: #{tpu_custom_call.1} parent=85 // loop_header
                  %s765 = sphi 0, %s767
                  %p766 = scmp.ge.s32.totalorder %s765, %s763
                  %s770 = sphi 0, %s779
                  %s771 = sphi %s695, %s782
                  %s772 = sphi %s706, %s783
                $region89: #{tpu_custom_call.1} parent=85 // loop_header_branch
                  %769 = sbr.rel (%p766) target = $region93
                $region90: #{tpu_custom_call.1} parent=85 // loop_body
                  %v773 = vld [vmem:[%s771] sm:$0xff]
                  %774 = vst [vmem:[%s772] sm:$0xff] %v773
                  %v775 = vld [vmem:[%s771 + $0x8] sm:$0xff]
                  %776 = vst [vmem:[%s772 + $0x8] sm:$0xff] %v775
                  %s777 = sadd.s32 1, %s770
                  %p778 = scmp.ge.s32.totalorder %s777, %s763
                  %s779 = scalar_select %p778, 0, %s777
                  %s780 = smul.u32 %s779, 16
                  %s781 = smul.u32 %s779, 16
                  %s782 = scalar_lea.vmem %s695, %s780 [#allocation6]
                  %s783 = scalar_lea.vmem %s706, %s781
                $region91: #{tpu_custom_call.1} parent=85 // loop_footer
                  %s767 = sadd.s32 %s765, 1
                $region92: #{tpu_custom_call.1} parent=85 // loop_footer_branch
                  %764 = sbr.rel target = $region88
                $region93: #{tpu_custom_call.1} parent=85 // loop_exit
                  _
                %s784 = sshrl.u32 %s702, 1
                %s785 = sand.u32 %s702, 1
                %s786 = smul.u32 %s784, 2
                %s787 = smul.u32 8, %s786
                %s788 = scalar_lea.vmem %s695, %s787 [#allocation6]
                %s789 = smul.u32 8, %s786
                %s790 = scalar_lea.vmem %s706, %s789
                // While loop
                $region94: #{tpu_custom_call.1} parent=85 // loop_pre_header
                  _
                $region95: #{tpu_custom_call.1} parent=85 // loop_header
                  %s792 = sphi 0, %s794
                  %p793 = scmp.ge.s32.totalorder %s792, %s785
                  %s797 = sphi 0, %s804
                  %s798 = sphi %s788, %s807
                  %s799 = sphi %s790, %s808
                $region96: #{tpu_custom_call.1} parent=85 // loop_header_branch
                  %796 = sbr.rel (%p793) target = $region100
                $region97: #{tpu_custom_call.1} parent=85 // loop_body
                  %v800 = vld [vmem:[%s798] sm:$0xff]
                  %801 = vst [vmem:[%s799] sm:$0xff] %v800
                  %s802 = sadd.s32 1, %s797
                  %p803 = scmp.ge.s32.totalorder %s802, %s785
                  %s804 = scalar_select %p803, 0, %s802
                  %s805 = smul.u32 %s804, 8
                  %s806 = smul.u32 %s804, 8
                  %s807 = scalar_lea.vmem %s788, %s805 [#allocation6]
                  %s808 = scalar_lea.vmem %s790, %s806
                $region98: #{tpu_custom_call.1} parent=85 // loop_footer
                  %s794 = sadd.s32 %s792, 1
                $region99: #{tpu_custom_call.1} parent=85 // loop_footer_branch
                  %791 = sbr.rel target = $region95
                $region100: #{tpu_custom_call.1} parent=85 // loop_exit
                  _
              $region86: #{tpu_custom_call.1} parent=63 // pred_fallthru
                _
              // Predicated region
              $region101: #{tpu_custom_call.1} parent=63 // pred_check
                _
              $region102: #{tpu_custom_call.1} parent=63 // pred_check_branch
                %810 = sbr.rel target = $region104
              $region103: #{tpu_custom_call.1} parent=63 // pred_region
                _
              $region104: #{tpu_custom_call.1} parent=63 // pred_fallthru
                _
            $region64: #{tpu_custom_call.1} parent=59 // pred_fallthru
              _
            // Predicated region
            $region65: #{tpu_custom_call.1} parent=59 // pred_check
              _
            $region66: #{tpu_custom_call.1} parent=59 // pred_check_branch
              %713 = sbr.rel target = $region68
            $region67: #{tpu_custom_call.1} parent=59 // pred_region
              %s715 = sshrl.u32 %s702, 1
              // While loop
              $region69: #{tpu_custom_call.1} parent=67 // loop_pre_header
                _
              $region70: #{tpu_custom_call.1} parent=67 // loop_header
                %s717 = sphi 0, %s719
                %p718 = scmp.ge.s32.totalorder %s717, %s715
                %s722 = sphi 0, %s731
                %s723 = sphi %s695, %s734
                %s724 = sphi %s706, %s735
              $region71: #{tpu_custom_call.1} parent=67 // loop_header_branch
                %721 = sbr.rel (%p718) target = $region75
              $region72: #{tpu_custom_call.1} parent=67 // loop_body
                %v725 = vld [vmem:[%s723] sm:$0xff]
                %726 = vst [vmem:[%s724] sm:$0xff] %v725
                %v727 = vld [vmem:[%s723 + $0x8] sm:$0xff]
                %728 = vst [vmem:[%s724 + $0x8] sm:$0xff] %v727
                %s729 = sadd.s32 1, %s722
                %p730 = scmp.ge.s32.totalorder %s729, %s715
                %s731 = scalar_select %p730, 0, %s729
                %s732 = smul.u32 %s731, 16
                %s733 = smul.u32 %s731, 16
                %s734 = scalar_lea.vmem %s695, %s732 [#allocation6]
                %s735 = scalar_lea.vmem %s706, %s733
              $region73: #{tpu_custom_call.1} parent=67 // loop_footer
                %s719 = sadd.s32 %s717, 1
              $region74: #{tpu_custom_call.1} parent=67 // loop_footer_branch
                %716 = sbr.rel target = $region70
              $region75: #{tpu_custom_call.1} parent=67 // loop_exit
                _
              %s736 = sshrl.u32 %s702, 1
              %s737 = sand.u32 %s702, 1
              %s738 = smul.u32 %s736, 2
              %s739 = smul.u32 8, %s738
              %s740 = scalar_lea.vmem %s695, %s739 [#allocation6]
              %s741 = smul.u32 8, %s738
              %s742 = scalar_lea.vmem %s706, %s741
              // While loop
              $region76: #{tpu_custom_call.1} parent=67 // loop_pre_header
                _
              $region77: #{tpu_custom_call.1} parent=67 // loop_header
                %s744 = sphi 0, %s746
                %p745 = scmp.ge.s32.totalorder %s744, %s737
                %s749 = sphi 0, %s756
                %s750 = sphi %s740, %s759
                %s751 = sphi %s742, %s760
              $region78: #{tpu_custom_call.1} parent=67 // loop_header_branch
                %748 = sbr.rel (%p745) target = $region82
              $region79: #{tpu_custom_call.1} parent=67 // loop_body
                %v752 = vld [vmem:[%s750] sm:$0xff]
                %753 = vst [vmem:[%s751] sm:$0xff] %v752
                %s754 = sadd.s32 1, %s749
                %p755 = scmp.ge.s32.totalorder %s754, %s737
                %s756 = scalar_select %p755, 0, %s754
                %s757 = smul.u32 %s756, 8
                %s758 = smul.u32 %s756, 8
                %s759 = scalar_lea.vmem %s740, %s757 [#allocation6]
                %s760 = scalar_lea.vmem %s742, %s758
              $region80: #{tpu_custom_call.1} parent=67 // loop_footer
                %s746 = sadd.s32 %s744, 1
              $region81: #{tpu_custom_call.1} parent=67 // loop_footer_branch
                %743 = sbr.rel target = $region77
              $region82: #{tpu_custom_call.1} parent=67 // loop_exit
                _
            $region68: #{tpu_custom_call.1} parent=59 // pred_fallthru
              _
          $region60: #{tpu_custom_call.1} parent=55 // pred_fallthru
            _
          %811 = vnop
        $region56: #{tpu_custom_call.1} parent=43 // pred_fallthru
          _
      $region44: #{tpu_custom_call.1} parent=5 // pred_fallthru
        _
      %p812 = scmp.le.s32.totalorder 2, %s14
      // Predicated region
      $region105: #{tpu_custom_call.1} parent=5 // pred_check
        %p813 = pneg %p812
      $region106: #{tpu_custom_call.1} parent=5 // pred_check_branch
        %815 = sbr.rel (%p813) target = $region108
      $region107: #{tpu_custom_call.1} parent=5 // pred_region
        %s816 = ssub.s32 %s14, 2
        // Predicated region
        $region109: #{tpu_custom_call.1} parent=107 // pred_check
          %p817 = pneg %p174
        $region110: #{tpu_custom_call.1} parent=107 // pred_check_branch
          %819 = sbr.rel (%p817) target = $region112
        $region111: #{tpu_custom_call.1} parent=107 // pred_region
          %s820 = sand.u32 %s159, 1
          %s821 = sand.u32 %s159, 1
          %s822 = smul.addr %s821, 16
          %s823 = scalar_lea.vmem [#allocation6], %s822
        $region112: #{tpu_custom_call.1} parent=107 // pred_fallthru
          _
      $region108: #{tpu_custom_call.1} parent=5 // pred_fallthru
        _
    $region6: #{tpu_custom_call.1} parent=1 // loop_footer
      %s18 = sadd.s32 1, %s14
    $region7: #{tpu_custom_call.1} parent=1 // loop_footer_branch
      %13 = sbr.rel target = $region3
    $region8: #{tpu_custom_call.1} parent=1 // loop_exit
      _
    %824 = vsyncpa [#allocation3], 1
    %s825 = scalar_lea.sflag [#allocation3], 1
    %826 = vsyncpa %s825, 1
    %827 = vsyncpa [#allocation4], 1
    %s828 = scalar_lea.sflag [#allocation4], 1
    %829 = vsyncpa %s828, 1

</llo_original>
